<compile_context>
chip_gen: v7x
topology: tpu7x:2x2x1
jax: 0.10.0
libtpu: 0.0.40
codegen_flags: <defaults>
</compile_context>

<pallas_src>
import jax
import jax.numpy as jnp
from jax import lax
from jax.experimental import pallas as pl
from jax.experimental.pallas import tpu as pltpu

LANE = 128
BN_EPS = 1e-5
MASK_BIG = 1e30          # representable in bf16 (same exponent range as f32)
# approx reciprocal: softmax rows sum to 1 +/- ~1e-3 (EUP slot, frees VALU);
# set False for exact parity with DGL GATConv.
APPROX_RECIP = True
# demo fits easily; raise for big tiles on v5e/v6e (128 MiB phys),
# keep <= ~48 MiB on v7x (64 MiB phys).
VMEM_LIMIT = 32 * 1024 * 1024


def _ceil_to(x, m):
    return ((x + m - 1) // m) * m


def _score_dtype():
    # bf16 VALU / EUP are native on v6e / v7x -> run the (tile_n, N) score /
    # softmax working set in bf16 there; keep f32 on v5e and older chips.
    try:
        kind = jax.devices()[0].device_kind.lower()
    except Exception:
        kind = ""
    if ("v6" in kind) or ("v7" in kind) or ("tpu7" in kind):
        return jnp.bfloat16
    return jnp.float32


def _pick_dst_tile(n):
    # dst-tile rows: >= 8 sublanes and a (8,128)-legal block everywhere.
    # VMEM budget note (v7x): per grid step the attention kernel holds the
    # int8 adj tile (tile_n x N, x2 buffers) + z (N x 128 bf16, x2) + the
    # score working set; tile_n <= 256 keeps this far under the 64 MiB budget.
    if n <= 256:
        return n
    for t in (256, 128):
        if n % t == 0:
            return t
    return n


# ----------------------------------------------------------------------------
# Kernel 1: BatchNorm apply (cross-tile batch stats) + fused bf16 projection.
# ----------------------------------------------------------------------------
def _make_bnproj_kernel(*, n_total, n_tiles, E, fpout, has_bn, has_proj, has_res):
    def kernel(*refs):
        it = iter(refs)
        h_ref = next(it)
        if has_bn:
            stats_ref = next(it)
            gamma_ref = next(it)
            beta_ref = next(it)
        if has_proj:
            w_ref = next(it)
        hnorm_ref = next(it)
        if has_proj:
            z_ref = next(it)
            esrcT_ref = next(it)
            edst_ref = next(it)
            res_ref = next(it) if has_res else None

        h = h_ref[...]                                        # (t, Fin) f32
        if has_bn:
            st = stats_ref[...]                               # (T*8, Fin)
            ssum = st[0:1, :]
            ssq = st[1:2, :]
            for t in range(1, n_tiles):                       # cross-tile reduce
                ssum = ssum + st[8 * t:8 * t + 1, :]
                ssq = ssq + st[8 * t + 1:8 * t + 2, :]
            inv_n = 1.0 / float(n_total)
            mean = ssum * inv_n
            var = jnp.maximum(ssq * inv_n - mean * mean, 0.0)
            scale = lax.rsqrt(var + BN_EPS) * gamma_ref[...]
            h = (h - mean) * scale + beta_ref[...]
        hnorm_ref[...] = h

        if has_proj:
            # ONE fused bf16 matmul: [ z_0..z_{E-1} | logits | res_0..res_{E-1} ]
            p = jnp.dot(h.astype(jnp.bfloat16), w_ref[...],
                        preferred_element_type=jnp.float32)   # (t, Wtot) f32
            zw = E * fpout
            z_ref[...] = p[:, :zw].astype(jnp.bfloat16)
            lg = p[:, zw:zw + LANE]                           # (t, 128) attention logits
            lgT = lg.T                                        # ONE transpose per tile/layer
            rows = h.shape[0]
            for e in range(E):                                # static unroll
                esrcT_ref[e, :, :] = jnp.broadcast_to(lgT[e:e + 1, :], (8, rows))
                edst_ref[e, :, :] = jnp.broadcast_to(lg[:, E + e:E + e + 1], (rows, 8))
            if has_res:
                res_ref[...] = p[:, zw + LANE:]
    return kernel


def _bn_project(h, stats, gamma, beta, wfused, *, E, fpout, tile_n,
                has_bn, has_proj, has_res):
    N, fpin = h.shape
    T = N // tile_n
    kernel = _make_bnproj_kernel(n_total=N, n_tiles=T, E=E, fpout=fpout,
                                 has_bn=has_bn, has_proj=has_proj, has_res=has_res)

    inputs = [h]
    in_specs = [pl.BlockSpec((tile_n, fpin), lambda i: (i, 0))]
    if has_bn:
        inputs += [stats, gamma, beta]
        in_specs += [pl.BlockSpec((T * 8, fpin), lambda i: (0, 0)),
                     pl.BlockSpec((1, fpin), lambda i: (0, 0)),
                     pl.BlockSpec((1, fpin), lambda i: (0, 0))]
    if has_proj:
        wtot = wfused.shape[1]
        inputs += [wfused]
        in_specs += [pl.BlockSpec((fpin, wtot), lambda i: (0, 0))]

    out_shape = [jax.ShapeDtypeStruct((N, fpin), jnp.float32)]
    out_specs = [pl.BlockSpec((tile_n, fpin), lambda i: (i, 0))]
    if has_proj:
        zw = E * fpout
        out_shape += [jax.ShapeDtypeStruct((N, zw), jnp.bfloat16),
                      jax.ShapeDtypeStruct((E, 8, N), jnp.float32),
                      jax.ShapeDtypeStruct((E, N, 8), jnp.float32)]
        out_specs += [pl.BlockSpec((tile_n, zw), lambda i: (i, 0)),
                      pl.BlockSpec((E, 8, tile_n), lambda i: (0, 0, i)),
                      pl.BlockSpec((E, tile_n, 8), lambda i: (0, i, 0))]
        if has_res:
            out_shape += [jax.ShapeDtypeStruct((N, zw), jnp.float32)]
            out_specs += [pl.BlockSpec((tile_n, zw), lambda i: (i, 0))]

    outs = pl.pallas_call(
        kernel,
        grid=(T,),
        in_specs=in_specs,
        out_specs=out_specs,
        out_shape=out_shape,
        compiler_params=pltpu.CompilerParams(
            dimension_semantics=("parallel",),
            vmem_limit_bytes=VMEM_LIMIT),
    )(*inputs)
    return list(outs)


# ----------------------------------------------------------------------------
# Kernel 2: GAT attention + per-edge-type residual/bias/activation + hetero-sum.
# Grid = (dst_tiles 'parallel', edge_types 'arbitrary'); adjacency streamed.
# ----------------------------------------------------------------------------
def _make_attn_kernel(*, E, act, sdt):
    def kernel(z_ref, esrcT_ref, edst_ref, res_ref, adj_ref, bias_ref,
               out_ref, stats_ref):
        e = pl.program_id(1)

        @pl.when(e == 0)
        def _init():
            out_ref[...] = jnp.zeros_like(out_ref)

        el = esrcT_ref[0, 0:1, :].astype(sdt)       # (1, N)  src logits
        er = edst_ref[0, :, 0:1].astype(sdt)        # (t, 1)  dst logits
        maskf = adj_ref[0].astype(sdt)              # (t, N)  ONE int8->float convert

        s = el + er                                 # (t, N) score
        s = jnp.maximum(s, 0.2 * s)                 # leaky_relu(0.2)
        s = s + (maskf - 1.0) * MASK_BIG            # additive mask, no select
        m = jnp.max(s, axis=-1, keepdims=True)
        p = jnp.exp(s - m) * maskf                  # masked; zero-in-degree rows -> 0
        denom = jnp.sum(p.astype(jnp.float32), axis=-1, keepdims=True)

        # un-normalized alpha through the MXU; rescale the small (t, F) result
        rst = jnp.dot(p.astype(jnp.bfloat16), z_ref[...],
                      preferred_element_type=jnp.float32)
        rst = rst * pl.reciprocal(jnp.maximum(denom, 1e-20), approx=APPROX_RECIP)

        o = rst + res_ref[...] + bias_ref[0, 0:1, :]
        if act:
            o = jnp.maximum(o, 0.0)                 # ReLU per edge type
        out_ref[...] += o                           # HeteroGraphConv 'sum'

        # per-dst-tile BatchNorm partial stats (sum / sumsq) via MXU matmuls
        @pl.when(e == E - 1)
        def _stats():
            oo = out_ref[...]
            rows = oo.shape[0]
            ones8 = jnp.ones((8, rows), jnp.float32)
            s1 = jnp.dot(ones8, oo, preferred_element_type=jnp.float32)
            s2 = jnp.dot(ones8, oo * oo, preferred_element_type=jnp.float32)
            stats_ref[...] = jnp.concatenate(
                [s1[0:1], s2[0:1], jnp.zeros((6, oo.shape[1]), jnp.float32)], axis=0)
    return kernel


def _gat_attention(z, esrcT, edst, res_src, adj, bias_pad, *, act, tile_n, sdt,
                   res_learned):
    E, N, _ = adj.shape
    F = z.shape[1] // E
    T = N // tile_n
    kernel = _make_attn_kernel(E=E, act=act, sdt=sdt)

    if res_learned:
        res_spec = pl.BlockSpec((tile_n, F), lambda i, e: (i, e))   # learned residual
    else:
        res_spec = pl.BlockSpec((tile_n, F), lambda i, e: (i, 0))   # identity residual

    in_specs = [
        pl.BlockSpec((N, F), lambda i, e: (0, e)),              # z (all src, per edge type)
        pl.BlockSpec((1, 8, N), lambda i, e: (e, 0, 0)),        # src logits (row layout)
        pl.BlockSpec((1, tile_n, 8), lambda i, e: (e, i, 0)),   # dst logits (col layout)
        res_spec,                                               # residual source
        pl.BlockSpec((1, tile_n, N), lambda i, e: (e, i, 0)),   # int8 adjacency (streamed)
        pl.BlockSpec((1, 8, F), lambda i, e: (e, 0, 0)),        # GATConv bias
    ]
    out_shape = [jax.ShapeDtypeStruct((N, F), jnp.float32),
                 jax.ShapeDtypeStruct((T * 8, F), jnp.float32)]
    out_specs = [pl.BlockSpec((tile_n, F), lambda i, e: (i, 0)),
                 pl.BlockSpec((8, F), lambda i, e: (i, 0))]

    acc, stats = pl.pallas_call(
        kernel,
        grid=(T, E),
        in_specs=in_specs,
        out_specs=out_specs,
        out_shape=out_shape,
        compiler_params=pltpu.CompilerParams(
            dimension_semantics=("parallel", "arbitrary"),   # dst tiles across TCs (v7x)
            vmem_limit_bytes=VMEM_LIMIT),
    )(z, esrcT, edst, res_src, adj, bias_pad)
    return acc, stats


# ----------------------------------------------------------------------------
# HeteroConv.forward equivalent.
# ----------------------------------------------------------------------------
def hetero_conv_forward(feat, layers, adjs):
    """feat: [N, in_feats] f32; layers: packed params from init_params;
    adjs: one [E, N, N] int8 adjacency per hconv layer (adj[e,i,j]=1 iff j->i)."""
    N = feat.shape[0]
    assert N % 8 == 0
    E = adjs[0].shape[0]
    sdt = _score_dtype()
    tile_n = _pick_dst_tile(N)
    assert N % tile_n == 0

    # pad raw input features to a lane-dense 128 multiple (zero columns)
    fpin0 = layers[0]["fpin"]
    h = jnp.pad(feat, ((0, 0), (0, fpin0 - feat.shape[1])))

    # projection for layer 0 (no preceding BatchNorm)
    proj = _bn_project(h, None, None, None, layers[0]["wfused"],
                       E=E, fpout=layers[0]["fpout"], tile_n=tile_n,
                       has_bn=False, has_proj=True,
                       has_res=not layers[0]["res_identity"])

    n_hconv = len(layers)
    h_final = None
    for l, lp in enumerate(layers):
        if lp["res_identity"]:
            hnorm, z, esrcT, edst = proj
            res_src, res_learned = hnorm, False
        else:
            hnorm, z, esrcT, edst, res_all = proj
            res_src, res_learned = res_all, True

        acc, stats = _gat_attention(z, esrcT, edst, res_src, adjs[l],
                                    lp["bias_pad"], act=lp["act"],
                                    tile_n=tile_n, sdt=sdt,
                                    res_learned=res_learned)

        if l + 1 < n_hconv:
            nxt = layers[l + 1]
            proj = _bn_project(acc, stats, lp["gamma"], lp["beta"], nxt["wfused"],
                               E=E, fpout=nxt["fpout"], tile_n=tile_n,
                               has_bn=True, has_proj=True,
                               has_res=not nxt["res_identity"])
        else:
            h_final = _bn_project(acc, stats, lp["gamma"], lp["beta"], None,
                                  E=E, fpout=lp["fpout"], tile_n=tile_n,
                                  has_bn=True, has_proj=False, has_res=False)[0]

    return {"Node": h_final[:, :layers[-1]["fout"]]}


# ----------------------------------------------------------------------------
# Deterministic parameter construction (synthetic init, no checkpoint).
# Weights are repacked once on the host into the fused, 128-lane-aligned layout:
#   wfused = [ W_0 | .. | W_{E-1} | w_logit | Wres_0 | .. ]  (Fin_pad, Wtot) bf16
#     w_logit col e   = W_e @ a_l_e   (src attention-logit weights)
#     w_logit col E+e = W_e @ a_r_e   (dst attention-logit weights)
#   bias_pad  = per-edge-type GATConv bias     (E, 8, Fout_pad) f32
#   gamma/beta = BatchNorm affine over the padded width (pad cols: 1 / 0)
# ----------------------------------------------------------------------------
def init_params(key, etypes, n_layers, in_feats, hid_feats, emb_feats, num_heads=1):
    assert num_heads == 1  # TODO(synk): num_heads > 1 not implemented
    E = len(etypes)
    dims = [(in_feats, hid_feats, True)]
    for _ in range(n_layers - 1):
        dims.append((hid_feats * num_heads, hid_feats, True))
    dims.append((hid_feats * num_heads, emb_feats, False))

    layers = []
    for (fin, fout, act) in dims:
        key, k1, k2, k3 = jax.random.split(key, 4)
        W = 0.1 * jax.random.normal(k1, (E, fin, fout), jnp.float32)
        attn = 0.1 * jax.random.normal(k2, (E, 3, fout), jnp.float32)  # a_l, a_r, bias
        res_identity = (fin == fout * num_heads)                       # DGL residual rule

        fpin = _ceil_to(fin, LANE)
        fpout = _ceil_to(fout * num_heads, LANE)
        zw = E * fpout
        wtot = zw + LANE + (0 if res_identity else zw)

        wf = jnp.zeros((fpin, wtot), jnp.float32)
        for e in range(E):
            wf = wf.at[:fin, e * fpout:e * fpout + fout].set(W[e])
            wf = wf.at[:fin, zw + e].set(W[e] @ attn[e, 0, :])
            wf = wf.at[:fin, zw + E + e].set(W[e] @ attn[e, 1, :])
        if not res_identity:
            Wres = 0.1 * jax.random.normal(k3, (E, fin, fout), jnp.float32)
            for e in range(E):
                wf = wf.at[:fin, zw + LANE + e * fpout:
                                 zw + LANE + e * fpout + fout].set(Wres[e])

        bias_pad = jnp.zeros((E, 8, fpout), jnp.float32)
        bias_pad = bias_pad.at[:, 0, :fout].set(attn[:, 2, :])

        layers.append({
            "wfused": wf.astype(jnp.bfloat16),   # bf16 weights, f32 accumulation
            "bias_pad": bias_pad,
            "gamma": jnp.ones((1, fpout), jnp.float32),
            "beta": jnp.zeros((1, fpout), jnp.float32),
            "fin": fin, "fout": fout * num_heads,
            "fpin": fpin, "fpout": fpout,
            "act": act, "res_identity": res_identity,
        })
    return layers, key


if __name__ == "__main__":
    key = jax.random.PRNGKey(0)

    # small shapes consistent with the module
    N = 64                    # number of graph nodes (per block)
    in_feats = 16
    hid_feats = 32
    emb_feats = 32
    n_layers = 2              # -> 3 hconv layers total, 3 batchnorms
    num_heads = 1
    etypes = ["follows", "likes"]
    E = len(etypes)

    layers, key = init_params(
        key, etypes, n_layers, in_feats, hid_feats, emb_feats, num_heads)

    # node features  (blocks[0].ndata['feat'])
    key, kf = jax.random.split(key)
    feat = jax.random.normal(kf, (N, in_feats), jnp.float32)

    # one dense adjacency [E, N, N] per hconv layer (per "block"), int8 mask:
    # adj[e, i, j] = 1 iff there is an edge  src j -> dst i  of type e.
    adjs = []
    for _ in range(n_layers + 1):
        key, ka = jax.random.split(key)
        adjs.append((jax.random.uniform(ka, (E, N, N)) < 0.15).astype(jnp.int8))

    out = hetero_conv_forward(feat, layers, adjs)
    out = jax.block_until_ready(out)

    h_out = out["Node"]
    assert h_out.shape == (N, emb_feats * num_heads), h_out.shape
    assert bool(jnp.all(jnp.isfinite(h_out)))
    print("KERNEL_OK")
</pallas_src>

<mosaic_0001>
module attributes {stable_mosaic.version = 11 : i64} {
  func.func @kernel(%arg0: i32, %arg1: memref<64x128xf32, #tpu.memory_space<vmem>>, %arg2: memref<128x640xbf16, #tpu.memory_space<vmem>>, %arg3: memref<64x128xf32, #tpu.memory_space<vmem>>, %arg4: memref<64x256xbf16, #tpu.memory_space<vmem>>, %arg5: memref<2x8x64xf32, #tpu.memory_space<vmem>>, %arg6: memref<2x64x8xf32, #tpu.memory_space<vmem>>, %arg7: memref<64x256xf32, #tpu.memory_space<vmem>>) attributes {dimension_semantics = [#tpu.dimension_semantics<parallel>], iteration_bounds = array<i64: 1>, scalar_prefetch = 0 : i64, scratch_operands = 0 : i64, tpu.core_type = #tpu.core_type<tc>, window_params = [{transform_indices = @transform_0, window_bounds = array<i64: 64, 128>}, {pipeline_mode = #tpu.pipeline_mode<synchronous>, transform_indices = @transform_1, window_bounds = array<i64: 128, 640>}, {transform_indices = @transform_2, window_bounds = array<i64: 64, 128>}, {transform_indices = @transform_3, window_bounds = array<i64: 64, 256>}, {transform_indices = @transform_4, window_bounds = array<i64: 2, 8, 64>}, {transform_indices = @transform_5, window_bounds = array<i64: 2, 64, 8>}, {transform_indices = @transform_6, window_bounds = array<i64: 64, 256>}]} {
    %c0 = arith.constant 0 : index
    %c0_0 = arith.constant 0 : index
    %0 = vector.load %arg1[%c0, %c0_0] : memref<64x128xf32, #tpu.memory_space<vmem>>, vector<64x128xf32>
    %c0_1 = arith.constant 0 : index
    %c0_2 = arith.constant 0 : index
    %1 = vector.load %arg3[%c0_1, %c0_2] : memref<64x128xf32, #tpu.memory_space<vmem>>, vector<64x128xf32>
    tpu.vector_store %arg3[%c0_1, %c0_2], %0 {strides = array<i32>} : memref<64x128xf32, #tpu.memory_space<vmem>>, vector<64x128xf32>,
    %2 = arith.truncf %0 : vector<64x128xf32> to vector<64x128xbf16>
    %c0_3 = arith.constant 0 : index
    %c0_4 = arith.constant 0 : index
    %3 = vector.load %arg2[%c0_3, %c0_4] : memref<128x640xbf16, #tpu.memory_space<vmem>>, vector<128x640xbf16>
    %cst = arith.constant dense<0.000000e+00> : vector<64x640xf32>
    %4 = tpu.matmul %2, %3, %cst {dimension_numbers = #tpu.dot_dimension_numbers<[1], [0], [0], [1], [0, 0, 1, 1], [], []>} : vector<64x128xbf16>, vector<128x640xbf16>, vector<64x640xf32> -> vector<64x640xf32>
    %5 = vector.extract_strided_slice %4 {offsets = [0, 0], sizes = [64, 256], strides = [1, 1]} : vector<64x640xf32> to vector<64x256xf32>
    %6 = arith.truncf %5 : vector<64x256xf32> to vector<64x256xbf16>
    %c0_5 = arith.constant 0 : index
    %c0_6 = arith.constant 0 : index
    %7 = vector.load %arg4[%c0_5, %c0_6] : memref<64x256xbf16, #tpu.memory_space<vmem>>, vector<64x256xbf16>
    tpu.vector_store %arg4[%c0_5, %c0_6], %6 {strides = array<i32>} : memref<64x256xbf16, #tpu.memory_space<vmem>>, vector<64x256xbf16>,
    %8 = vector.extract_strided_slice %4 {offsets = [0, 256], sizes = [64, 128], strides = [1, 1]} : vector<64x640xf32> to vector<64x128xf32>
    %9 = tpu.transpose %8, [1, 0] : vector<64x128xf32> -> vector<128x64xf32>
    %10 = vector.extract_strided_slice %9 {offsets = [0, 0], sizes = [1, 64], strides = [1, 1]} : vector<128x64xf32> to vector<1x64xf32>
    %11 = vector.shape_cast %10 : vector<1x64xf32> to vector<1x64xf32>
    %12 = vector.broadcast %11 : vector<1x64xf32> to vector<8x64xf32>
    %c0_7 = arith.constant 0 : index
    %c0_8 = arith.constant 0 : index
    %c0_9 = arith.constant 0 : index
    %13 = vector.load %arg5[%c0_7, %c0_8, %c0_9] : memref<2x8x64xf32, #tpu.memory_space<vmem>>, vector<1x8x64xf32>
    %14 = vector.shape_cast %13 : vector<1x8x64xf32> to vector<8x64xf32>
    %15 = vector.shape_cast %12 : vector<8x64xf32> to vector<1x8x64xf32>
    tpu.vector_store %arg5[%c0_7, %c0_8, %c0_9], %15 {strides = array<i32>} : memref<2x8x64xf32, #tpu.memory_space<vmem>>, vector<1x8x64xf32>,
    %16 = vector.extract_strided_slice %8 {offsets = [0, 2], sizes = [64, 1], strides = [1, 1]} : vector<64x128xf32> to vector<64x1xf32>
    %17 = vector.shape_cast %16 : vector<64x1xf32> to vector<64x1xf32>
    %18 = vector.broadcast %17 : vector<64x1xf32> to vector<64x8xf32>
    %c0_10 = arith.constant 0 : index
    %c0_11 = arith.constant 0 : index
    %c0_12 = arith.constant 0 : index
    %19 = vector.load %arg6[%c0_10, %c0_11, %c0_12] : memref<2x64x8xf32, #tpu.memory_space<vmem>>, vector<1x64x8xf32>
    %20 = vector.shape_cast %19 : vector<1x64x8xf32> to vector<64x8xf32>
    %21 = vector.shape_cast %18 : vector<64x8xf32> to vector<1x64x8xf32>
    tpu.vector_store %arg6[%c0_10, %c0_11, %c0_12], %21 {strides = array<i32>} : memref<2x64x8xf32, #tpu.memory_space<vmem>>, vector<1x64x8xf32>,
    %22 = vector.extract_strided_slice %9 {offsets = [1, 0], sizes = [1, 64], strides = [1, 1]} : vector<128x64xf32> to vector<1x64xf32>
    %23 = vector.shape_cast %22 : vector<1x64xf32> to vector<1x64xf32>
    %24 = vector.broadcast %23 : vector<1x64xf32> to vector<8x64xf32>
    %c1 = arith.constant 1 : index
    %c0_13 = arith.constant 0 : index
    %c0_14 = arith.constant 0 : index
    %25 = vector.load %arg5[%c1, %c0_13, %c0_14] : memref<2x8x64xf32, #tpu.memory_space<vmem>>, vector<1x8x64xf32>
    %26 = vector.shape_cast %25 : vector<1x8x64xf32> to vector<8x64xf32>
    %27 = vector.shape_cast %24 : vector<8x64xf32> to vector<1x8x64xf32>
    tpu.vector_store %arg5[%c1, %c0_13, %c0_14], %27 {strides = array<i32>} : memref<2x8x64xf32, #tpu.memory_space<vmem>>, vector<1x8x64xf32>,
    %28 = vector.extract_strided_slice %8 {offsets = [0, 3], sizes = [64, 1], strides = [1, 1]} : vector<64x128xf32> to vector<64x1xf32>
    %29 = vector.shape_cast %28 : vector<64x1xf32> to vector<64x1xf32>
    %30 = vector.broadcast %29 : vector<64x1xf32> to vector<64x8xf32>
    %c1_15 = arith.constant 1 : index
    %c0_16 = arith.constant 0 : index
    %c0_17 = arith.constant 0 : index
    %31 = vector.load %arg6[%c1_15, %c0_16, %c0_17] : memref<2x64x8xf32, #tpu.memory_space<vmem>>, vector<1x64x8xf32>
    %32 = vector.shape_cast %31 : vector<1x64x8xf32> to vector<64x8xf32>
    %33 = vector.shape_cast %30 : vector<64x8xf32> to vector<1x64x8xf32>
    tpu.vector_store %arg6[%c1_15, %c0_16, %c0_17], %33 {strides = array<i32>} : memref<2x64x8xf32, #tpu.memory_space<vmem>>, vector<1x64x8xf32>,
    %34 = vector.extract_strided_slice %4 {offsets = [0, 384], sizes = [64, 256], strides = [1, 1]} : vector<64x640xf32> to vector<64x256xf32>
    %c0_18 = arith.constant 0 : index
    %c0_19 = arith.constant 0 : index
    %35 = vector.load %arg7[%c0_18, %c0_19] : memref<64x256xf32, #tpu.memory_space<vmem>>, vector<64x256xf32>
    tpu.vector_store %arg7[%c0_18, %c0_19], %34 {strides = array<i32>} : memref<64x256xf32, #tpu.memory_space<vmem>>, vector<64x256xf32>,
    return
  }
  func.func @transform_0(%arg0: i32) -> (i32, i32) {
    %c0_i32 = arith.constant 0 : i32
    %c0_i32_0 = arith.constant 0 : i32
    return %arg0, %c0_i32 : i32, i32
  }
  func.func @transform_1(%arg0: i32) -> (i32, i32) {
    %c0_i32 = arith.constant 0 : i32
    %c0_i32_0 = arith.constant 0 : i32
    %c0_i32_1 = arith.constant 0 : i32
    return %c0_i32, %c0_i32_0 : i32, i32
  }
  func.func @transform_2(%arg0: i32) -> (i32, i32) {
    %c0_i32 = arith.constant 0 : i32
    %c0_i32_0 = arith.constant 0 : i32
    return %arg0, %c0_i32 : i32, i32
  }
  func.func @transform_3(%arg0: i32) -> (i32, i32) {
    %c0_i32 = arith.constant 0 : i32
    %c0_i32_0 = arith.constant 0 : i32
    return %arg0, %c0_i32 : i32, i32
  }
  func.func @transform_4(%arg0: i32) -> (i32, i32, i32) {
    %c0_i32 = arith.constant 0 : i32
    %c0_i32_0 = arith.constant 0 : i32
    %c0_i32_1 = arith.constant 0 : i32
    return %c0_i32, %c0_i32_0, %arg0 : i32, i32, i32
  }
  func.func @transform_5(%arg0: i32) -> (i32, i32, i32) {
    %c0_i32 = arith.constant 0 : i32
    %c0_i32_0 = arith.constant 0 : i32
    %c0_i32_1 = arith.constant 0 : i32
    return %c0_i32, %arg0, %c0_i32_0 : i32, i32, i32
  }
  func.func @transform_6(%arg0: i32) -> (i32, i32) {
    %c0_i32 = arith.constant 0 : i32
    %c0_i32_0 = arith.constant 0 : i32
    return %arg0, %c0_i32 : i32, i32
  }
}

</mosaic_0001>

<llo_original>
// kernel: tpu_custom_call.1
$region0: #{tpu_custom_call.1}
  #allocation0 [shape = 'u32[]', space=smem, size = 0x4, offset = 0x4, fixed_abs, tag = 'smem constant byte address 0x4 - core index']
  #allocation1 [shape = 'u32[144,128]{1,0:T(1,128)}', space=vmem, size = 0x12000, scoped, tag = 'internal scratch']
  %s0 = inlined_call_operand.hbm [shape: f32[64,128], index: 0, kind: input, shape index: {}]
  %s1 = inlined_call_operand.hbm [shape: bf16[128,640], index: 1, kind: input, shape index: {}]
  %s2 = inlined_call_operand.hbm [shape: f32[64,128], index: 2, kind: output, shape index: {0}]
  %s3 = inlined_call_operand.hbm [shape: bf16[64,256], index: 3, kind: output, shape index: {1}]
  %s4 = inlined_call_operand.hbm [shape: f32[2,8,64], index: 4, kind: output, shape index: {2}]
  %s5 = inlined_call_operand.vmem [shape: f32[2,64,8], index: 5, kind: output, shape index: {3}]
  %s6 = inlined_call_operand.hbm [shape: f32[64,256], index: 6, kind: output, shape index: {4}]
  %7 = xla_tuple %s2, %s3, %s4, %s5, %s6
  %s8 = sld [smem:[#allocation0]]
  $region58: #{tpu_custom_call.1} parent=0
    _
  %s10 = ssub.s32 1, %s8
  %s11 = scalar_select 0, %s10, %s8
  $region1: #{tpu_custom_call.1} parent=0
    #allocation2 [shape = 'u8[32768]{0}', space=vmem, size = 0x8000, scoped, tag = 'input window, operand 0, single buffered']
    #allocation3 [shape = 's32[1]{0}', space=sflag, size = 0x4, scoped, tag = 'scoped memory for tpu_custom_call.1']
    #allocation4 [shape = 's32[1]{0}', space=sflag, size = 0x4, scoped, tag = 'scoped memory for tpu_custom_call.1']
    #allocation5 [shape = 'u8[163840]{0}', space=vmem, size = 0x28000, scoped, tag = 'input window, operand 1, single buffered']
    #allocation6 [shape = 's32[1]{0}', space=sflag, size = 0x4, scoped, tag = 'scoped memory for tpu_custom_call.1']
    #allocation7 [shape = 'u8[32768]{0}', space=vmem, size = 0x8000, scoped, tag = 'output window, operand 0, single buffered']
    #allocation8 [shape = 'u8[32768]{0}', space=vmem, size = 0x8000, scoped, tag = 'output window, operand 1, single buffered']
    #allocation9 [shape = 's32[1]{0}', space=sflag, size = 0x4, scoped, tag = 'scoped memory for tpu_custom_call.1']
    #allocation10 [shape = 'u8[8192]{0}', space=vmem, size = 0x2000, scoped, tag = 'output window, operand 2, single buffered']
    #allocation11 [shape = 'u8[65536]{0}', space=vmem, size = 0x10000, scoped, tag = 'output window, operand 4, single buffered']
    #allocation12 [shape = 's32[1]{0}', space=sflag, size = 0x4, scoped, tag = 'scoped memory for tpu_custom_call.1']
    %12 = vsyncpa [#allocation3], 0
    %13 = vsyncpa [#allocation6], 0
    %14 = vsyncpa [#allocation4], 0
    %15 = vsyncpa [#allocation9], 0
    %16 = vsyncpa [#allocation12], 0
    // Predicated region
    $region2: #{tpu_custom_call.1} parent=1 // pred_check
      _
    $region3: #{tpu_custom_call.1} parent=1 // pred_check_branch
      %18 = sbr.rel (0) target = $region5
    $region4: #{tpu_custom_call.1} parent=1 // pred_region
      %s20 = ssub.s32 1024, 1024
      %21 = vsyncadd [#allocation3], %s20
      %s22 = sshll.u32 [#allocation2], 4
      %s23 = int_to_ptr.vmem [resolvable:$true] %s22
      %28 = dma.hbm_to_vmem [thread:$0]  %s0, 1024, %s23, [#allocation3], 128, 128, 8
    $region5: #{tpu_custom_call.1} parent=1 // pred_fallthru
      _
    // Predicated region
    $region6: #{tpu_custom_call.1} parent=1 // pred_check
      _
    $region7: #{tpu_custom_call.1} parent=1 // pred_check_branch
      %30 = sbr.rel (0) target = $region9
    $region8: #{tpu_custom_call.1} parent=1 // pred_region
      %s32 = ssub.s32 5120, 5120
      %33 = vsyncadd [#allocation6], %s32
      %s34 = sshll.u32 [#allocation5], 4
      %s35 = int_to_ptr.vmem [resolvable:$true] %s34
      %40 = dma.hbm_to_vmem [thread:$0]  %s1, 5120, %s35, [#allocation6], 320, 320, 20
    $region9: #{tpu_custom_call.1} parent=1 // pred_fallthru
      _
    // Predicated region
    $region10: #{tpu_custom_call.1} parent=1 // pred_check
      _
    $region11: #{tpu_custom_call.1} parent=1 // pred_check_branch
      %42 = sbr.rel (0) target = $region13
    $region12: #{tpu_custom_call.1} parent=1 // pred_region
      %43 = dma.done [#allocation3], 1024
    $region13: #{tpu_custom_call.1} parent=1 // pred_fallthru
      _
    // Predicated region
    $region14: #{tpu_custom_call.1} parent=1 // pred_check
      _
    $region15: #{tpu_custom_call.1} parent=1 // pred_check_branch
      %45 = sbr.rel (0) target = $region17
    $region16: #{tpu_custom_call.1} parent=1 // pred_region
      %46 = dma.done [#allocation6], 5120
    $region17: #{tpu_custom_call.1} parent=1 // pred_fallthru
      _
    %v48 = vld [vmem:[#allocation2] sm:$0xff]
    %v49 = vld [vmem:[#allocation2 + $0x8] sm:$0xff]
    %v50 = vld [vmem:[#allocation2 + $0x10] sm:$0xff]
    %v51 = vld [vmem:[#allocation2 + $0x18] sm:$0xff]
    %v52 = vld [vmem:[#allocation2 + $0x20] sm:$0xff]
    %v53 = vld [vmem:[#allocation2 + $0x28] sm:$0xff]
    %v54 = vld [vmem:[#allocation2 + $0x30] sm:$0xff]
    %v55 = vld [vmem:[#allocation2 + $0x38] sm:$0xff]
    %56 = vst [vmem:[#allocation7] sm:$0xff] %v48
    %57 = vst [vmem:[#allocation7 + $0x8] sm:$0xff] %v49
    %58 = vst [vmem:[#allocation7 + $0x10] sm:$0xff] %v50
    %59 = vst [vmem:[#allocation7 + $0x18] sm:$0xff] %v51
    %60 = vst [vmem:[#allocation7 + $0x20] sm:$0xff] %v52
    %61 = vst [vmem:[#allocation7 + $0x28] sm:$0xff] %v53
    %62 = vst [vmem:[#allocation7 + $0x30] sm:$0xff] %v54
    %63 = vst [vmem:[#allocation7 + $0x38] sm:$0xff] %v55
    %v64 = vpack.c.bf16 %v49, %v48
    %v65 = vpack.c.bf16 %v51, %v50
    %v66 = vpack.c.bf16 %v53, %v52
    %v67 = vpack.c.bf16 %v55, %v54
    %v68 = vld [vmem:[#allocation5] sm:$0xff]
    %v69 = vld [vmem:[#allocation5 + $0x8] sm:$0xff]
    %v70 = vld [vmem:[#allocation5 + $0x10] sm:$0xf]
    %v71 = vld [vmem:[#allocation5 + $0x14] sm:$0xff]
    %v72 = vld [vmem:[#allocation5 + $0x1c] sm:$0xff]
    %v73 = vld [vmem:[#allocation5 + $0x24] sm:$0xf]
    %v74 = vld [vmem:[#allocation5 + $0x28] sm:$0xff]
    %v75 = vld [vmem:[#allocation5 + $0x30] sm:$0xff]
    %v76 = vld [vmem:[#allocation5 + $0x38] sm:$0xf]
    %v77 = vld [vmem:[#allocation5 + $0x3c] sm:$0xff]
    %v78 = vld [vmem:[#allocation5 + $0x44] sm:$0xff]
    %v79 = vld [vmem:[#allocation5 + $0x4c] sm:$0xf]
    %v80 = vld [vmem:[#allocation5 + $0x50] sm:$0xff]
    %v81 = vld [vmem:[#allocation5 + $0x58] sm:$0xff]
    %v82 = vld [vmem:[#allocation5 + $0x60] sm:$0xf]
    %v83 = vld [vmem:[#allocation5 + $0x64] sm:$0xff]
    %v84 = vld [vmem:[#allocation5 + $0x6c] sm:$0xff]
    %v85 = vld [vmem:[#allocation5 + $0x74] sm:$0xf]
    %v86 = vld [vmem:[#allocation5 + $0x78] sm:$0xff]
    %v87 = vld [vmem:[#allocation5 + $0x80] sm:$0xff]
    %v88 = vld [vmem:[#allocation5 + $0x88] sm:$0xf]
    %v89 = vld [vmem:[#allocation5 + $0x8c] sm:$0xff]
    %v90 = vld [vmem:[#allocation5 + $0x94] sm:$0xff]
    %v91 = vld [vmem:[#allocation5 + $0x9c] sm:$0xf]
    %v92 = vld [vmem:[#allocation5 + $0xa0] sm:$0xff]
    %v93 = vld [vmem:[#allocation5 + $0xa8] sm:$0xff]
    %v94 = vld [vmem:[#allocation5 + $0xb0] sm:$0xf]
    %v95 = vld [vmem:[#allocation5 + $0xb4] sm:$0xff]
    %v96 = vld [vmem:[#allocation5 + $0xbc] sm:$0xff]
    %v97 = vld [vmem:[#allocation5 + $0xc4] sm:$0xf]
    %v98 = vld [vmem:[#allocation5 + $0xc8] sm:$0xff]
    %v99 = vld [vmem:[#allocation5 + $0xd0] sm:$0xff]
    %v100 = vld [vmem:[#allocation5 + $0xd8] sm:$0xf]
    %v101 = vld [vmem:[#allocation5 + $0xdc] sm:$0xff]
    %v102 = vld [vmem:[#allocation5 + $0xe4] sm:$0xff]
    %v103 = vld [vmem:[#allocation5 + $0xec] sm:$0xf]
    %v104 = vld [vmem:[#allocation5 + $0xf0] sm:$0xff]
    %v105 = vld [vmem:[#allocation5 + $0xf8] sm:$0xff]
    %v106 = vld [vmem:[#allocation5 + $0x100] sm:$0xf]
    %v107 = vld [vmem:[#allocation5 + $0x104] sm:$0xff]
    %v108 = vld [vmem:[#allocation5 + $0x10c] sm:$0xff]
    %v109 = vld [vmem:[#allocation5 + $0x114] sm:$0xf]
    %v110 = vld [vmem:[#allocation5 + $0x118] sm:$0xff]
    %v111 = vld [vmem:[#allocation5 + $0x120] sm:$0xff]
    %v112 = vld [vmem:[#allocation5 + $0x128] sm:$0xf]
    %v113 = vld [vmem:[#allocation5 + $0x12c] sm:$0xff]
    %v114 = vld [vmem:[#allocation5 + $0x134] sm:$0xff]
    %v115 = vld [vmem:[#allocation5 + $0x13c] sm:$0xf]
    %v164 = vunpack.c.l.b16 %v68
    %v165 = vunpack.c.h.b16 %v68
    %v166 = vunpack.c.l.b16 %v69
    %v167 = vunpack.c.h.b16 %v69
    %v168 = vunpack.c.l.b16 %v70
    %v169 = vunpack.c.l.b16 %v71
    %v170 = vunpack.c.h.b16 %v71
    %v171 = vunpack.c.l.b16 %v72
    %v172 = vunpack.c.h.b16 %v72
    %v173 = vunpack.c.l.b16 %v73
    %v174 = vunpack.c.l.b16 %v74
    %v175 = vunpack.c.h.b16 %v74
    %v176 = vunpack.c.l.b16 %v75
    %v177 = vunpack.c.h.b16 %v75
    %v178 = vunpack.c.l.b16 %v76
    %v179 = vunpack.c.l.b16 %v77
    %v180 = vunpack.c.h.b16 %v77
    %v181 = vunpack.c.l.b16 %v78
    %v182 = vunpack.c.h.b16 %v78
    %v183 = vunpack.c.l.b16 %v79
    %v184 = vunpack.c.l.b16 %v80
    %v185 = vunpack.c.h.b16 %v80
    %v186 = vunpack.c.l.b16 %v81
    %v187 = vunpack.c.h.b16 %v81
    %v188 = vunpack.c.l.b16 %v82
    %v189 = vunpack.c.l.b16 %v83
    %v190 = vunpack.c.h.b16 %v83
    %v191 = vunpack.c.l.b16 %v84
    %v192 = vunpack.c.h.b16 %v84
    %v193 = vunpack.c.l.b16 %v85
    %v194 = vunpack.c.l.b16 %v86
    %v195 = vunpack.c.h.b16 %v86
    %v196 = vunpack.c.l.b16 %v87
    %v197 = vunpack.c.h.b16 %v87
    %v198 = vunpack.c.l.b16 %v88
    %v199 = vunpack.c.l.b16 %v89
    %v200 = vunpack.c.h.b16 %v89
    %v201 = vunpack.c.l.b16 %v90
    %v202 = vunpack.c.h.b16 %v90
    %v203 = vunpack.c.l.b16 %v91
    %v204 = vunpack.c.l.b16 %v92
    %v205 = vunpack.c.h.b16 %v92
    %v206 = vunpack.c.l.b16 %v93
    %v207 = vunpack.c.h.b16 %v93
    %v208 = vunpack.c.l.b16 %v94
    %v209 = vunpack.c.l.b16 %v95
    %v210 = vunpack.c.h.b16 %v95
    %v211 = vunpack.c.l.b16 %v96
    %v212 = vunpack.c.h.b16 %v96
    %v213 = vunpack.c.l.b16 %v97
    %v214 = vunpack.c.l.b16 %v98
    %v215 = vunpack.c.h.b16 %v98
    %v216 = vunpack.c.l.b16 %v99
    %v217 = vunpack.c.h.b16 %v99
    %v218 = vunpack.c.l.b16 %v100
    %v219 = vunpack.c.l.b16 %v101
    %v220 = vunpack.c.h.b16 %v101
    %v221 = vunpack.c.l.b16 %v102
    %v222 = vunpack.c.h.b16 %v102
    %v223 = vunpack.c.l.b16 %v103
    %v224 = vunpack.c.l.b16 %v104
    %v225 = vunpack.c.h.b16 %v104
    %v226 = vunpack.c.l.b16 %v105
    %v227 = vunpack.c.h.b16 %v105
    %v228 = vunpack.c.l.b16 %v106
    %v229 = vunpack.c.l.b16 %v107
    %v230 = vunpack.c.h.b16 %v107
    %v231 = vunpack.c.l.b16 %v108
    %v232 = vunpack.c.h.b16 %v108
    %v233 = vunpack.c.l.b16 %v109
    %v234 = vunpack.c.l.b16 %v110
    %v235 = vunpack.c.h.b16 %v110
    %v236 = vunpack.c.l.b16 %v111
    %v237 = vunpack.c.h.b16 %v111
    %v238 = vunpack.c.l.b16 %v112
    %v239 = vunpack.c.l.b16 %v113
    %v240 = vunpack.c.h.b16 %v113
    %v241 = vunpack.c.l.b16 %v114
    %v242 = vunpack.c.h.b16 %v114
    %v243 = vunpack.c.l.b16 %v115
    %v244 = vpack.c.b16 %v169, %v164
    %v245 = vpack.c.b16 %v170, %v165
    %v246 = vpack.c.b16 %v171, %v166
    %v247 = vpack.c.b16 %v172, %v167
    %v248 = vpack.c.b16 %v173, %v168
    %v249 = vpack.c.b16 %v179, %v174
    %v250 = vpack.c.b16 %v180, %v175
    %v251 = vpack.c.b16 %v181, %v176
    %v252 = vpack.c.b16 %v182, %v177
    %v253 = vpack.c.b16 %v183, %v178
    %v254 = vpack.c.b16 %v189, %v184
    %v255 = vpack.c.b16 %v190, %v185
    %v256 = vpack.c.b16 %v191, %v186
    %v257 = vpack.c.b16 %v192, %v187
    %v258 = vpack.c.b16 %v193, %v188
    %v259 = vpack.c.b16 %v199, %v194
    %v260 = vpack.c.b16 %v200, %v195
    %v261 = vpack.c.b16 %v201, %v196
    %v262 = vpack.c.b16 %v202, %v197
    %v263 = vpack.c.b16 %v203, %v198
    %v264 = vpack.c.b16 %v209, %v204
    %v265 = vpack.c.b16 %v210, %v205
    %v266 = vpack.c.b16 %v211, %v206
    %v267 = vpack.c.b16 %v212, %v207
    %v268 = vpack.c.b16 %v213, %v208
    %v269 = vpack.c.b16 %v219, %v214
    %v270 = vpack.c.b16 %v220, %v215
    %v271 = vpack.c.b16 %v221, %v216
    %v272 = vpack.c.b16 %v222, %v217
    %v273 = vpack.c.b16 %v223, %v218
    %v274 = vpack.c.b16 %v229, %v224
    %v275 = vpack.c.b16 %v230, %v225
    %v276 = vpack.c.b16 %v231, %v226
    %v277 = vpack.c.b16 %v232, %v227
    %v278 = vpack.c.b16 %v233, %v228
    %v279 = vpack.c.b16 %v239, %v234
    %v280 = vpack.c.b16 %v240, %v235
    %v281 = vpack.c.b16 %v241, %v236
    %v282 = vpack.c.b16 %v242, %v237
    %v283 = vpack.c.b16 %v243, %v238
    %324 = vmatprep.subr.bf16.mxu0 %v245
    %325 = vmatpush1.bf16.msra.mxu0 %v244
    %326 = vmatprep.subr.bf16.mxu0 %v250
    %327 = vmatpush1.bf16.msra.mxu0 %v249
    %328 = vmatprep.subr.bf16.mxu0 %v255
    %329 = vmatpush1.bf16.msra.mxu0 %v254
    %330 = vmatprep.subr.bf16.mxu0 %v260
    %331 = vmatpush1.bf16.msra.mxu0 %v259
    %332 = vmatprep.subr.bf16.mxu0 %v265
    %333 = vmatpush1.bf16.msra.mxu0 %v264
    %334 = vmatprep.subr.bf16.mxu0 %v270
    %335 = vmatpush1.bf16.msra.mxu0 %v269
    %336 = vmatprep.subr.bf16.mxu0 %v275
    %337 = vmatpush1.bf16.msra.mxu0 %v274
    %338 = vmatprep.subr.bf16.mxu0 %v280
    %339 = vmatpush1.bf16.msra.mxu0 %v279
    %340 = vmatprep.subr.bf16.mxu0 0
    %341 = vmatpush1.bf16.msra.mxu0 0
    %342 = vmatprep.subr.bf16.mxu0 0
    %343 = vmatpush1.bf16.msra.mxu0 0
    %344 = vmatprep.subr.bf16.mxu0 0
    %345 = vmatpush1.bf16.msra.mxu0 0
    %346 = vmatprep.subr.bf16.mxu0 0
    %347 = vmatpush1.bf16.msra.mxu0 0
    %348 = vmatprep.subr.bf16.mxu0 0
    %349 = vmatpush1.bf16.msra.mxu0 0
    %350 = vmatprep.subr.bf16.mxu0 0
    %351 = vmatpush1.bf16.msra.mxu0 0
    %352 = vmatprep.subr.bf16.mxu0 0
    %353 = vmatpush1.bf16.msra.mxu0 0
    %354 = vmatprep.subr.bf16.mxu0 0
    %355 = vmatpush1.bf16.msra.mxu0 0
    %356 = vmatprep.mubr.bf16.mxu0 0
    %357 = vmatmul.mubr.bf16.gmra.mrb[0].mxu0 %v64
    %v358 = vpop.f32.mrb[0].mxu0
    %v359 = vadd.f32 0.0, %v358
    %v360 = vpop.f32.mrb[0].mxu0
    %v361 = vadd.f32 0.0, %v360
    %v362 = vpop.f32.mrb[0].mxu0
    %v363 = vadd.f32 0.0, %v362
    %v364 = vpop.f32.mrb[0].mxu0
    %v365 = vadd.f32 0.0, %v364
    %366 = vmatprep.mubr.bf16.mxu0 0
    %367 = vmatmul.mubr.bf16.gmra.mrb[0].mxu0 %v65
    %v368 = vpop.f32.mrb[0].mxu0
    %v369 = vadd.f32 0.0, %v368
    %v370 = vpop.f32.mrb[0].mxu0
    %v371 = vadd.f32 0.0, %v370
    %v372 = vpop.f32.mrb[0].mxu0
    %v373 = vadd.f32 0.0, %v372
    %v374 = vpop.f32.mrb[0].mxu0
    %v375 = vadd.f32 0.0, %v374
    %376 = vmatprep.mubr.bf16.mxu0 0
    %377 = vmatmul.mubr.bf16.gmra.mrb[0].mxu0 %v66
    %v378 = vpop.f32.mrb[0].mxu0
    %v379 = vadd.f32 0.0, %v378
    %v380 = vpop.f32.mrb[0].mxu0
    %v381 = vadd.f32 0.0, %v380
    %v382 = vpop.f32.mrb[0].mxu0
    %v383 = vadd.f32 0.0, %v382
    %v384 = vpop.f32.mrb[0].mxu0
    %v385 = vadd.f32 0.0, %v384
    %386 = vmatprep.mubr.bf16.mxu0 0
    %387 = vmatmul.mubr.bf16.gmra.mrb[0].mxu0 %v67
    %v388 = vpop.f32.mrb[0].mxu0
    %v389 = vadd.f32 0.0, %v388
    %v390 = vpop.f32.mrb[0].mxu0
    %v391 = vadd.f32 0.0, %v390
    %v392 = vpop.f32.mrb[0].mxu0
    %v393 = vadd.f32 0.0, %v392
    %v394 = vpop.f32.mrb[0].mxu0
    %v395 = vadd.f32 0.0, %v394
    %396 = vdwg.mxu0
    %397 = vmatprep.subr.bf16.mxu0 %v247
    %398 = vmatpush1.bf16.msra.mxu0 %v246
    %399 = vmatprep.subr.bf16.mxu0 %v252
    %400 = vmatpush1.bf16.msra.mxu0 %v251
    %401 = vmatprep.subr.bf16.mxu0 %v257
    %402 = vmatpush1.bf16.msra.mxu0 %v256
    %403 = vmatprep.subr.bf16.mxu0 %v262
    %404 = vmatpush1.bf16.msra.mxu0 %v261
    %405 = vmatprep.subr.bf16.mxu0 %v267
    %406 = vmatpush1.bf16.msra.mxu0 %v266
    %407 = vmatprep.subr.bf16.mxu0 %v272
    %408 = vmatpush1.bf16.msra.mxu0 %v271
    %409 = vmatprep.subr.bf16.mxu0 %v277
    %410 = vmatpush1.bf16.msra.mxu0 %v276
    %411 = vmatprep.subr.bf16.mxu0 %v282
    %412 = vmatpush1.bf16.msra.mxu0 %v281
    %413 = vmatprep.subr.bf16.mxu0 0
    %414 = vmatpush1.bf16.msra.mxu0 0
    %415 = vmatprep.subr.bf16.mxu0 0
    %416 = vmatpush1.bf16.msra.mxu0 0
    %417 = vmatprep.subr.bf16.mxu0 0
    %418 = vmatpush1.bf16.msra.mxu0 0
    %419 = vmatprep.subr.bf16.mxu0 0
    %420 = vmatpush1.bf16.msra.mxu0 0
    %421 = vmatprep.subr.bf16.mxu0 0
    %422 = vmatpush1.bf16.msra.mxu0 0
    %423 = vmatprep.subr.bf16.mxu0 0
    %424 = vmatpush1.bf16.msra.mxu0 0
    %425 = vmatprep.subr.bf16.mxu0 0
    %426 = vmatpush1.bf16.msra.mxu0 0
    %427 = vmatprep.subr.bf16.mxu0 0
    %428 = vmatpush1.bf16.msra.mxu0 0
    %429 = vmatprep.mubr.bf16.mxu0 0
    %430 = vmatmul.mubr.bf16.gmra.mrb[0].mxu0 %v64
    %v431 = vpop.f32.mrb[0].mxu0
    %v432 = vadd.f32 0.0, %v431
    %v433 = vpop.f32.mrb[0].mxu0
    %v434 = vadd.f32 0.0, %v433
    %v435 = vpop.f32.mrb[0].mxu0
    %v436 = vadd.f32 0.0, %v435
    %v437 = vpop.f32.mrb[0].mxu0
    %v438 = vadd.f32 0.0, %v437
    %439 = vmatprep.mubr.bf16.mxu0 0
    %440 = vmatmul.mubr.bf16.gmra.mrb[0].mxu0 %v65
    %v441 = vpop.f32.mrb[0].mxu0
    %v442 = vadd.f32 0.0, %v441
    %v443 = vpop.f32.mrb[0].mxu0
    %v444 = vadd.f32 0.0, %v443
    %v445 = vpop.f32.mrb[0].mxu0
    %v446 = vadd.f32 0.0, %v445
    %v447 = vpop.f32.mrb[0].mxu0
    %v448 = vadd.f32 0.0, %v447
    %449 = vmatprep.mubr.bf16.mxu0 0
    %450 = vmatmul.mubr.bf16.gmra.mrb[0].mxu0 %v66
    %v451 = vpop.f32.mrb[0].mxu0
    %v452 = vadd.f32 0.0, %v451
    %v453 = vpop.f32.mrb[0].mxu0
    %v454 = vadd.f32 0.0, %v453
    %v455 = vpop.f32.mrb[0].mxu0
    %v456 = vadd.f32 0.0, %v455
    %v457 = vpop.f32.mrb[0].mxu0
    %v458 = vadd.f32 0.0, %v457
    %459 = vmatprep.mubr.bf16.mxu0 0
    %460 = vmatmul.mubr.bf16.gmra.mrb[0].mxu0 %v67
    %v461 = vpop.f32.mrb[0].mxu0
    %v462 = vadd.f32 0.0, %v461
    %v463 = vpop.f32.mrb[0].mxu0
    %v464 = vadd.f32 0.0, %v463
    %v465 = vpop.f32.mrb[0].mxu0
    %v466 = vadd.f32 0.0, %v465
    %v467 = vpop.f32.mrb[0].mxu0
    %v468 = vadd.f32 0.0, %v467
    %469 = vdwg.mxu0
    %470 = vmatprep.subr.bf16.mxu0 0
    %471 = vmatpush1.bf16.msra.mxu0 %v248
    %472 = vmatprep.subr.bf16.mxu0 0
    %473 = vmatpush1.bf16.msra.mxu0 %v253
    %474 = vmatprep.subr.bf16.mxu0 0
    %475 = vmatpush1.bf16.msra.mxu0 %v258
    %476 = vmatprep.subr.bf16.mxu0 0
    %477 = vmatpush1.bf16.msra.mxu0 %v263
    %478 = vmatprep.subr.bf16.mxu0 0
    %479 = vmatpush1.bf16.msra.mxu0 %v268
    %480 = vmatprep.subr.bf16.mxu0 0
    %481 = vmatpush1.bf16.msra.mxu0 %v273
    %482 = vmatprep.subr.bf16.mxu0 0
    %483 = vmatpush1.bf16.msra.mxu0 %v278
    %484 = vmatprep.subr.bf16.mxu0 0
    %485 = vmatpush1.bf16.msra.mxu0 %v283
    %486 = vmatprep.subr.bf16.mxu0 0
    %487 = vmatpush1.bf16.msra.mxu0 0
    %488 = vmatprep.subr.bf16.mxu0 0
    %489 = vmatpush1.bf16.msra.mxu0 0
    %490 = vmatprep.subr.bf16.mxu0 0
    %491 = vmatpush1.bf16.msra.mxu0 0
    %492 = vmatprep.subr.bf16.mxu0 0
    %493 = vmatpush1.bf16.msra.mxu0 0
    %494 = vmatprep.subr.bf16.mxu0 0
    %495 = vmatpush1.bf16.msra.mxu0 0
    %496 = vmatprep.subr.bf16.mxu0 0
    %497 = vmatpush1.bf16.msra.mxu0 0
    %498 = vmatprep.subr.bf16.mxu0 0
    %499 = vmatpush1.bf16.msra.mxu0 0
    %500 = vmatprep.subr.bf16.mxu0 0
    %501 = vmatpush1.bf16.msra.mxu0 0
    %502 = vmatprep.mubr.bf16.mxu0 0
    %503 = vmatmul.mubr.bf16.gmra.mrb[0].mxu0 %v64
    %v504 = vpop.f32.mrb[0].mxu0
    %v505 = vadd.f32 0.0, %v504
    %v506 = vpop.f32.mrb[0].mxu0
    %v507 = vpop.f32.mrb[0].mxu0
    %v508 = vadd.f32 0.0, %v507
    %v509 = vpop.f32.mrb[0].mxu0
    %510 = vmatprep.mubr.bf16.mxu0 0
    %511 = vmatmul.mubr.bf16.gmra.mrb[0].mxu0 %v65
    %v512 = vpop.f32.mrb[0].mxu0
    %v513 = vadd.f32 0.0, %v512
    %v514 = vpop.f32.mrb[0].mxu0
    %v515 = vpop.f32.mrb[0].mxu0
    %v516 = vadd.f32 0.0, %v515
    %v517 = vpop.f32.mrb[0].mxu0
    %518 = vmatprep.mubr.bf16.mxu0 0
    %519 = vmatmul.mubr.bf16.gmra.mrb[0].mxu0 %v66
    %v520 = vpop.f32.mrb[0].mxu0
    %v521 = vadd.f32 0.0, %v520
    %v522 = vpop.f32.mrb[0].mxu0
    %v523 = vpop.f32.mrb[0].mxu0
    %v524 = vadd.f32 0.0, %v523
    %v525 = vpop.f32.mrb[0].mxu0
    %526 = vmatprep.mubr.bf16.mxu0 0
    %527 = vmatmul.mubr.bf16.gmra.mrb[0].mxu0 %v67
    %v528 = vpop.f32.mrb[0].mxu0
    %v529 = vadd.f32 0.0, %v528
    %v530 = vpop.f32.mrb[0].mxu0
    %v531 = vpop.f32.mrb[0].mxu0
    %v532 = vadd.f32 0.0, %v531
    %v533 = vpop.f32.mrb[0].mxu0
    %534 = vdwg.mxu0
    %v535 = vpack.c.bf16 %v363, %v359
    %v536 = vpack.c.bf16 %v365, %v361
    %v537 = vpack.c.bf16 %v373, %v369
    %v538 = vpack.c.bf16 %v375, %v371
    %v539 = vpack.c.bf16 %v383, %v379
    %v540 = vpack.c.bf16 %v385, %v381
    %v541 = vpack.c.bf16 %v393, %v389
    %v542 = vpack.c.bf16 %v395, %v391
    %v551 = vunpack.c.l.b16 %v535
    %v552 = vunpack.c.l.b16 %v536
    %v553 = vunpack.c.h.b16 %v535
    %v554 = vunpack.c.h.b16 %v536
    %v555 = vunpack.c.l.b16 %v537
    %v556 = vunpack.c.l.b16 %v538
    %v557 = vunpack.c.h.b16 %v537
    %v558 = vunpack.c.h.b16 %v538
    %v559 = vunpack.c.l.b16 %v539
    %v560 = vunpack.c.l.b16 %v540
    %v561 = vunpack.c.h.b16 %v539
    %v562 = vunpack.c.h.b16 %v540
    %v563 = vunpack.c.l.b16 %v541
    %v564 = vunpack.c.l.b16 %v542
    %v565 = vunpack.c.h.b16 %v541
    %v566 = vunpack.c.h.b16 %v542
    %v567 = vpack.c.b16 %v552, %v551
    %v568 = vpack.c.b16 %v554, %v553
    %v569 = vpack.c.b16 %v556, %v555
    %v570 = vpack.c.b16 %v558, %v557
    %v571 = vpack.c.b16 %v560, %v559
    %v572 = vpack.c.b16 %v562, %v561
    %v573 = vpack.c.b16 %v564, %v563
    %v574 = vpack.c.b16 %v566, %v565
    %583 = vst [vmem:[#allocation8] sm:$0xff] %v567
    %584 = vst [vmem:[#allocation8 + $0x8] sm:$0xff] %v568
    %585 = vst [vmem:[#allocation8 + $0x10] sm:$0xff] %v569
    %586 = vst [vmem:[#allocation8 + $0x18] sm:$0xff] %v570
    %587 = vst [vmem:[#allocation8 + $0x20] sm:$0xff] %v571
    %588 = vst [vmem:[#allocation8 + $0x28] sm:$0xff] %v572
    %589 = vst [vmem:[#allocation8 + $0x30] sm:$0xff] %v573
    %590 = vst [vmem:[#allocation8 + $0x38] sm:$0xff] %v574
    %591 = vxpose.xlu0.b32.start [1/16] %v432, 128
    %592 = vxpose.xlu0.b32.cont [2/16] %v436, 128
    %593 = vxpose.xlu0.b32.cont [3/16] %v442, 128
    %594 = vxpose.xlu0.b32.cont [4/16] %v446, 128
    %595 = vxpose.xlu0.b32.cont [5/16] %v452, 128
    %596 = vxpose.xlu0.b32.cont [6/16] %v456, 128
    %597 = vxpose.xlu0.b32.cont [7/16] %v462, 128
    %598 = vxpose.xlu0.b32.cont [8/16] %v466, 128
    %599 = vxpose.xlu0.b32.cont [9/16] 0.0, 128
    %600 = vxpose.xlu0.b32.cont [10/16] 0.0, 128
    %601 = vxpose.xlu0.b32.cont [11/16] 0.0, 128
    %602 = vxpose.xlu0.b32.cont [12/16] 0.0, 128
    %603 = vxpose.xlu0.b32.cont [13/16] 0.0, 128
    %604 = vxpose.xlu0.b32.cont [14/16] 0.0, 128
    %605 = vxpose.xlu0.b32.cont [15/16] 0.0, 128
    %606 = vxpose.xlu0.b32.end [16/16] 0.0, 128
    %v607 = vpop.trf.xlu0
    %v608 = vpop.trf.xlu0
    %v609 = vpop.trf.xlu0
    %v610 = vpop.trf.xlu0
    %v611 = vpop.trf.xlu0
    %v612 = vpop.trf.xlu0
    %v613 = vpop.trf.xlu0
    %v614 = vpop.trf.xlu0
    %v615 = vpop.trf.xlu0
    %v616 = vpop.trf.xlu0
    %v617 = vpop.trf.xlu0
    %v618 = vpop.trf.xlu0
    %v619 = vpop.trf.xlu0
    %v620 = vpop.trf.xlu0
    %v621 = vpop.trf.xlu0
    %v622 = vpop.trf.xlu0
    %v623 = vlaneseq
    %v624 = vshrl.u32 %v623, 7
    %v625 = vsub.s32 0, %v624
    %v626 = vrot.slane %v607, %v625
    %vm627 = vcmask 523264
    %628 = vst.msk [vmem:[#allocation10] sm:$0xff] %vm627, %v626
    %630 = vset.pattern.permute.xlu0 2
    %631 = vperm.xlu0 %630, %v432
    %v632 = vpop.permute.xlu0 %631
    %635 = vset.pattern.permute.xlu0 2
    %636 = vperm.xlu0 %635, %v436
    %v637 = vpop.permute.xlu0 %636
    %640 = vset.pattern.permute.xlu0 2
    %641 = vperm.xlu0 %640, %v442
    %v642 = vpop.permute.xlu0 %641
    %645 = vset.pattern.permute.xlu0 2
    %646 = vperm.xlu0 %645, %v446
    %v647 = vpop.permute.xlu0 %646
    %650 = vset.pattern.permute.xlu0 2
    %651 = vperm.xlu0 %650, %v452
    %v652 = vpop.permute.xlu0 %651
    %655 = vset.pattern.permute.xlu0 2
    %656 = vperm.xlu0 %655, %v456
    %v657 = vpop.permute.xlu0 %656
    %660 = vset.pattern.permute.xlu0 2
    %661 = vperm.xlu0 %660, %v462
    %v662 = vpop.permute.xlu0 %661
    %665 = vset.pattern.permute.xlu0 2
    %666 = vperm.xlu0 %665, %v466
    %v667 = vpop.permute.xlu0 %666
    %vm669 = vcmask 64512
    %670 = vst.msk [vmem:[%s5] sm:$0xff] %vm669, %v632
    %671 = vst.msk [vmem:[%s5 + $0x8] sm:$0xff] %vm669, %v637
    %672 = vst.msk [vmem:[%s5 + $0x10] sm:$0xff] %vm669, %v642
    %673 = vst.msk [vmem:[%s5 + $0x18] sm:$0xff] %vm669, %v647
    %674 = vst.msk [vmem:[%s5 + $0x20] sm:$0xff] %vm669, %v652
    %675 = vst.msk [vmem:[%s5 + $0x28] sm:$0xff] %vm669, %v657
    %676 = vst.msk [vmem:[%s5 + $0x30] sm:$0xff] %vm669, %v662
    %677 = vst.msk [vmem:[%s5 + $0x38] sm:$0xff] %vm669, %v667
    %v678 = vlaneseq
    %v679 = vshrl.u32 %v678, 7
    %v680 = vsub.s32 1, %v679
    %v681 = vrot.slane %v607, %v680
    %s682 = scalar_lea.vmem [#allocation10], 8
    %683 = vst.msk [vmem:[%s682] sm:$0xff] %vm627, %v681
    %684 = vset.pattern.permute.xlu0 3
    %685 = vperm.xlu0 %684, %v432
    %v686 = vpop.permute.xlu0 %685
    %688 = vset.pattern.permute.xlu0 3
    %689 = vperm.xlu0 %688, %v436
    %v690 = vpop.permute.xlu0 %689
    %692 = vset.pattern.permute.xlu0 3
    %693 = vperm.xlu0 %692, %v442
    %v694 = vpop.permute.xlu0 %693
    %696 = vset.pattern.permute.xlu0 3
    %697 = vperm.xlu0 %696, %v446
    %v698 = vpop.permute.xlu0 %697
    %700 = vset.pattern.permute.xlu0 3
    %701 = vperm.xlu0 %700, %v452
    %v702 = vpop.permute.xlu0 %701
    %704 = vset.pattern.permute.xlu0 3
    %705 = vperm.xlu0 %704, %v456
    %v706 = vpop.permute.xlu0 %705
    %708 = vset.pattern.permute.xlu0 3
    %709 = vperm.xlu0 %708, %v462
    %v710 = vpop.permute.xlu0 %709
    %712 = vset.pattern.permute.xlu0 3
    %713 = vperm.xlu0 %712, %v466
    %v714 = vpop.permute.xlu0 %713
    %s716 = scalar_lea.vmem %s5, 64
    %717 = vst.msk [vmem:[%s716] sm:$0xff] %vm669, %v686
    %718 = vst.msk [vmem:[%s716 + $0x8] sm:$0xff] %vm669, %v690
    %719 = vst.msk [vmem:[%s716 + $0x10] sm:$0xff] %vm669, %v694
    %720 = vst.msk [vmem:[%s716 + $0x18] sm:$0xff] %vm669, %v698
    %721 = vst.msk [vmem:[%s716 + $0x20] sm:$0xff] %vm669, %v702
    %722 = vst.msk [vmem:[%s716 + $0x28] sm:$0xff] %vm669, %v706
    %723 = vst.msk [vmem:[%s716 + $0x30] sm:$0xff] %vm669, %v710
    %724 = vst.msk [vmem:[%s716 + $0x38] sm:$0xff] %vm669, %v714
    %725 = vst [vmem:[#allocation11] sm:$0xff] %v434
    %726 = vst [vmem:[#allocation11 + $0x8] sm:$0xff] %v505
    %727 = vst [vmem:[#allocation11 + $0x10] sm:$0xff] %v438
    %728 = vst [vmem:[#allocation11 + $0x18] sm:$0xff] %v508
    %729 = vst [vmem:[#allocation11 + $0x20] sm:$0xff] %v444
    %730 = vst [vmem:[#allocation11 + $0x28] sm:$0xff] %v513
    %731 = vst [vmem:[#allocation11 + $0x30] sm:$0xff] %v448
    %732 = vst [vmem:[#allocation11 + $0x38] sm:$0xff] %v516
    %733 = vst [vmem:[#allocation11 + $0x40] sm:$0xff] %v454
    %734 = vst [vmem:[#allocation11 + $0x48] sm:$0xff] %v521
    %735 = vst [vmem:[#allocation11 + $0x50] sm:$0xff] %v458
    %736 = vst [vmem:[#allocation11 + $0x58] sm:$0xff] %v524
    %737 = vst [vmem:[#allocation11 + $0x60] sm:$0xff] %v464
    %738 = vst [vmem:[#allocation11 + $0x68] sm:$0xff] %v529
    %739 = vst [vmem:[#allocation11 + $0x70] sm:$0xff] %v468
    %740 = vst [vmem:[#allocation11 + $0x78] sm:$0xff] %v532
    // Predicated region
    $region18: #{tpu_custom_call.1} parent=1 // pred_check
      _
    $region19: #{tpu_custom_call.1} parent=1 // pred_check_branch
      %742 = sbr.rel (0) target = $region21
    $region20: #{tpu_custom_call.1} parent=1 // pred_region
      %s744 = ssub.s32 1024, 1024
      %745 = vsyncadd [#allocation4], %s744
      %s746 = sshll.u32 [#allocation7], 4
      %s747 = int_to_ptr.vmem [resolvable:$true] %s746
      %752 = dma.vmem_to_hbm [thread:$0]  %s747, 1024, %s2, [#allocation4], 128, 128, 8
    $region21: #{tpu_custom_call.1} parent=1 // pred_fallthru
      _
    // Predicated region
    $region22: #{tpu_custom_call.1} parent=1 // pred_check
      _
    $region23: #{tpu_custom_call.1} parent=1 // pred_check_branch
      %754 = sbr.rel (0) target = $region25
    $region24: #{tpu_custom_call.1} parent=1 // pred_region
      %s756 = ssub.s32 1024, 1024
      %757 = vsyncadd [#allocation9], %s756
      %s758 = sshll.u32 [#allocation8], 4
      %s759 = int_to_ptr.vmem [resolvable:$true] %s758
      %764 = dma.vmem_to_hbm [thread:$0]  %s759, 1024, %s3, [#allocation9], 128, 128, 8
    $region25: #{tpu_custom_call.1} parent=1 // pred_fallthru
      _
    // Predicated region
    $region26: #{tpu_custom_call.1} parent=1 // pred_check
      _
    $region27: #{tpu_custom_call.1} parent=1 // pred_check_branch
      %766 = sbr.rel (0) target = $region29
    $region28: #{tpu_custom_call.1} parent=1 // pred_region
      %s768 = ssub.s32 256, 256
      %769 = vsyncadd [#allocation9], %s768
      %s770 = sshll.u32 [#allocation10], 4
      %s771 = int_to_ptr.vmem [resolvable:$true] %s770
      %776 = dma.vmem_to_hbm [thread:$0]  %s771, 256, %s4, [#allocation9], 128, 128, 8
    $region29: #{tpu_custom_call.1} parent=1 // pred_fallthru
      _
    // Predicated region
    $region30: #{tpu_custom_call.1} parent=1 // pred_check
      _
    $region31: #{tpu_custom_call.1} parent=1 // pred_check_branch
      %778 = sbr.rel (0) target = $region33
    $region32: #{tpu_custom_call.1} parent=1 // pred_region
      _
    $region33: #{tpu_custom_call.1} parent=1 // pred_fallthru
      _
    // Predicated region
    $region34: #{tpu_custom_call.1} parent=1 // pred_check
      _
    $region35: #{tpu_custom_call.1} parent=1 // pred_check_branch
      %780 = sbr.rel (0) target = $region37
    $region36: #{tpu_custom_call.1} parent=1 // pred_region
      %s782 = ssub.s32 2048, 2048
      %783 = vsyncadd [#allocation12], %s782
      %s784 = sshll.u32 [#allocation11], 4
      %s785 = int_to_ptr.vmem [resolvable:$true] %s784
      %790 = dma.vmem_to_hbm [thread:$0]  %s785, 2048, %s6, [#allocation12], 256, 256, 16
    $region37: #{tpu_custom_call.1} parent=1 // pred_fallthru
      _
    // Predicated region
    $region38: #{tpu_custom_call.1} parent=1 // pred_check
      _
    $region39: #{tpu_custom_call.1} parent=1 // pred_check_branch
      %792 = sbr.rel (0) target = $region41
    $region40: #{tpu_custom_call.1} parent=1 // pred_region
      %793 = dma.done [#allocation4], 1024
    $region41: #{tpu_custom_call.1} parent=1 // pred_fallthru
      _
    // Predicated region
    $region42: #{tpu_custom_call.1} parent=1 // pred_check
      _
    $region43: #{tpu_custom_call.1} parent=1 // pred_check_branch
      %795 = sbr.rel (0) target = $region45
    $region44: #{tpu_custom_call.1} parent=1 // pred_region
      %796 = dma.done [#allocation9], 1024
    $region45: #{tpu_custom_call.1} parent=1 // pred_fallthru
      _
    // Predicated region
    $region46: #{tpu_custom_call.1} parent=1 // pred_check
      _
    $region47: #{tpu_custom_call.1} parent=1 // pred_check_branch
      %798 = sbr.rel (0) target = $region49
    $region48: #{tpu_custom_call.1} parent=1 // pred_region
      %799 = dma.done [#allocation9], 256
    $region49: #{tpu_custom_call.1} parent=1 // pred_fallthru
      _
    // Predicated region
    $region50: #{tpu_custom_call.1} parent=1 // pred_check
      _
    $region51: #{tpu_custom_call.1} parent=1 // pred_check_branch
      %801 = sbr.rel (0) target = $region53
    $region52: #{tpu_custom_call.1} parent=1 // pred_region
      _
    $region53: #{tpu_custom_call.1} parent=1 // pred_fallthru
      _
    // Predicated region
    $region54: #{tpu_custom_call.1} parent=1 // pred_check
      _
    $region55: #{tpu_custom_call.1} parent=1 // pred_check_branch
      %803 = sbr.rel (0) target = $region57
    $region56: #{tpu_custom_call.1} parent=1 // pred_region
      %804 = dma.done [#allocation12], 2048
    $region57: #{tpu_custom_call.1} parent=1 // pred_fallthru
      _
    %805 = vsyncpa [#allocation3], 1
    %806 = vsyncpa [#allocation6], 1
    %807 = vsyncpa [#allocation4], 1
    %808 = vsyncpa [#allocation9], 1
    %809 = vsyncpa [#allocation12], 1

</llo_original>
